<compile_context>
chip_gen: v5e
topology: v5e:2x2
jax: 0.10.0
libtpu: 0.0.40
codegen_flags: <defaults>
</compile_context>

<pallas_src>
import jax
import jax.numpy as jnp
from jax.experimental import pallas as pl
from jax.experimental.pallas import tpu as pltpu


def _round_up(x, m):
    return ((x + m - 1) // m) * m


def _cdiv(a, b):
    return (a + b - 1) // b


def _embed_kernel(patch_ref, w_ref, pos_ref, out_ref):
    # patch_ref: (TN, Kp)  patch tile (compute dtype, e.g. bf16)
    # w_ref:     (Kp, E)   conv weight as matmul matrix (compute dtype)
    # pos_ref:   (TN, E)   position embeddings + conv bias (compute dtype)
    # out_ref:   (TN, E)
    y = jnp.dot(patch_ref[...], w_ref[...],
                preferred_element_type=jnp.float32)        # MXU, f32 accumulate
    out_ref[...] = (y + pos_ref[...].astype(jnp.float32)).astype(out_ref.dtype)
    # TODO(synk): dropout_prob > 0 would need pltpu.prng_* masking; prob=0 here.


def embeddings_forward(x_nchw, conv_w, conv_b, pos_emb, *, patch_size,
                       compute_dtype=jnp.bfloat16, tn_target=512):
    """Forward pass of `Embeddings`.

    x_nchw: (B, C, H, W); conv_w: (E, C, ph, pw); conv_b: (E,);
    pos_emb: (1, N, E).  Returns (B, N, E) in x_nchw.dtype.
    """
    B, C, H, W = x_nchw.shape
    E = conv_w.shape[0]
    ph = pw = patch_size
    assert H % ph == 0 and W % pw == 0, "H/W must be divisible by patch_size"
    Hp, Wp = H // ph, W // pw
    N = Hp * Wp
    K = C * ph * pw
    assert pos_emb.shape == (1, N, E)

    out_dtype = x_nchw.dtype
    cbytes = jnp.dtype(compute_dtype).itemsize
    obytes = jnp.dtype(out_dtype).itemsize

    # Only the contraction dim is padded (lane-dense K for the MXU); E is the
    # full last dim of every block and N's ragged last tile is masked by Pallas.
    K_pad = _round_up(K, 128)

    # Sequence tile: multiple of 16 (bf16 sublane packing), large enough to
    # amortize the ~0.35us per-grid-step overhead.  tn_target should be a
    # multiple of 256 for full MXU M passes.
    TN = min(int(tn_target), _round_up(N, 16))
    if B == 1:
        # Keep >= 4 N tiles at batch 1 so both v7x TensorCores get work and
        # DMA/compute overlap survives.
        TN = min(TN, max(16, _round_up(_cdiv(N, 4), 16)))
    n_tiles = _cdiv(N, TN)

    # Batch is the fastest-varying (innermost) grid axis: the pos(+bias) block
    # index only depends on the N axis, so it is NOT re-fetched per batch elem.
    grid = (n_tiles, B)

    # Glue: extract patches in (C, ph, pw) flatten order, matching the PyTorch
    # Conv2d weight layout (E, C, ph, pw) reshaped to (K, E).
    # (B, C, Hp, ph, Wp, pw) -> (B, Hp, Wp, C, ph, pw) -> (B, N, K)
    patches = x_nchw.reshape(B, C, Hp, ph, Wp, pw)
    patches = patches.transpose(0, 2, 4, 1, 3, 5).reshape(B, N, K)
    if K_pad != K:
        patches = jnp.pad(patches, ((0, 0), (0, 0), (0, K_pad - K)))
    patches = patches.astype(compute_dtype)

    w_mat = conv_w.reshape(E, K).T                                     # (K, E)
    if K_pad != K:
        w_mat = jnp.pad(w_mat, ((0, K_pad - K), (0, 0)))
    w_mat = w_mat.astype(compute_dtype)

    # Fold the conv bias into the position embeddings (one fewer DMA stream);
    # carry the result in the compute dtype (2 bytes for bf16) to halve its
    # HBM traffic.  The add happens in f32 inside the kernel.
    pos_plus_b = (pos_emb.astype(jnp.float32)[0]
                  + conv_b.astype(jnp.float32)[None, :]).astype(compute_dtype)

    cost = pl.CostEstimate(
        flops=2 * B * N * K_pad * E,
        transcendentals=0,
        bytes_accessed=(B * N * K_pad * cbytes        # patches
                        + K_pad * E * cbytes          # weight (fetched once)
                        + N * E * cbytes              # pos (+bias), reused over B
                        + B * N * E * obytes))        # output

    # VMEM budget: actual double-buffered tiles * 1.5 headroom, capped well
    # below physical VMEM (v7x has only 64 MiB).
    tile_bytes = (2 * TN * K_pad * cbytes       # patch tiles
                  + 2 * TN * E * cbytes         # pos tiles
                  + 2 * TN * E * obytes         # output tiles
                  + 2 * K_pad * E * cbytes)     # weight (constant block index)
    try:
        vmem_cap = pltpu.get_tpu_info().vmem_capacity_bytes
    except Exception:
        vmem_cap = 64 * 1024 * 1024
    vmem_limit = int(min(max(int(tile_bytes * 1.5), 8 * 1024 * 1024),
                         48 * 1024 * 1024,
                         vmem_cap - 8 * 1024 * 1024))

    out = pl.pallas_call(
        _embed_kernel,
        out_shape=jax.ShapeDtypeStruct((B, N, E), out_dtype),
        grid_spec=pltpu.PrefetchScalarGridSpec(
            num_scalar_prefetch=0,
            grid=grid,
            in_specs=[
                pl.BlockSpec((pl.Squeezed(), TN, K_pad), lambda n, b: (b, n, 0)),
                pl.BlockSpec((K_pad, E), lambda n, b: (0, 0)),
                pl.BlockSpec((TN, E), lambda n, b: (n, 0)),
            ],
            out_specs=pl.BlockSpec((pl.Squeezed(), TN, E),
                                   lambda n, b: (b, n, 0)),
        ),
        compiler_params=pltpu.CompilerParams(
            dimension_semantics=("parallel", "parallel"),
            vmem_limit_bytes=vmem_limit,
            allow_input_fusion=[True, False, False],
        ),
        cost_estimate=cost,
    )(patches, w_mat, pos_plus_b)

    return out


def reference_forward(x_nchw, conv_w, conv_b, pos_emb, patch_size):
    """Pure-JAX reference (lax conv) for verification."""
    y = jax.lax.conv_general_dilated(
        x_nchw, conv_w,
        window_strides=(patch_size, patch_size),
        padding="VALID",
        dimension_numbers=("NCHW", "OIHW", "NCHW"),
    ) + conv_b[None, :, None, None]
    B, E, Hp, Wp = y.shape
    y = y.reshape(B, E, Hp * Wp).transpose(0, 2, 1)   # flatten(2).transpose(1,2)
    return y + pos_emb


if __name__ == "__main__":
    # Small shapes consistent with the module:
    #   batch=2, in_chans=4, H=W=16, patch_size=4 -> patch_num=16, embed_dim=32
    B, C, H, W = 2, 4, 16, 16
    patch_size = 4
    patch_num = (H // patch_size) * (W // patch_size)   # 16
    embed_dim = 32

    key = jax.random.PRNGKey(0)
    k_x, k_w, k_b, k_pos = jax.random.split(key, 4)

    x = jax.random.normal(k_x, (B, C, H, W), dtype=jnp.float32)
    conv_w = jax.random.normal(
        k_w, (embed_dim, C, patch_size, patch_size), dtype=jnp.float32) * 0.02
    conv_b = jax.random.normal(k_b, (embed_dim,), dtype=jnp.float32) * 0.02
    pos_emb = jax.random.uniform(
        k_pos, (1, patch_num, embed_dim), dtype=jnp.float32)  # torch.rand equiv.

    embed_jit = jax.jit(
        embeddings_forward,
        static_argnames=("patch_size", "compute_dtype", "tn_target"))

    ref = reference_forward(x, conv_w, conv_b, pos_emb, patch_size)

    # f32-operand MXU path (parity path): tolerance covers possible bf16-pass
    # differences between the Pallas MXU matmul and the XLA conv reference.
    out_f32 = embed_jit(x, conv_w, conv_b, pos_emb, patch_size=patch_size,
                        compute_dtype=jnp.float32)
    out_f32 = jax.block_until_ready(out_f32)
    assert out_f32.shape == (B, patch_num, embed_dim)
    assert jnp.allclose(out_f32, ref, atol=5e-3, rtol=5e-3), "f32 mismatch"

    # bf16-operand / f32-accumulate MXU path (recommended on v5e/v6e/v7x).
    out_bf16 = embed_jit(x, conv_w, conv_b, pos_emb, patch_size=patch_size,
                         compute_dtype=jnp.bfloat16)
    out_bf16 = jax.block_until_ready(out_bf16)
    assert out_bf16.shape == (B, patch_num, embed_dim)
    assert jnp.allclose(out_bf16, ref, atol=2e-2, rtol=2e-2), "bf16 mismatch"

    print("KERNEL_OK")
</pallas_src>

<mosaic_0001>
module attributes {stable_mosaic.version = 11 : i64} {
  func.func @_embed_kernel(%arg0: i32, %arg1: i32, %arg2: memref<1x16x128xf32, #tpu.memory_space<vmem>>, %arg3: memref<128x32xf32, #tpu.memory_space<vmem>>, %arg4: memref<16x32xf32, #tpu.memory_space<vmem>>, %arg5: memref<1x16x32xf32, #tpu.memory_space<vmem>>) attributes {dimension_semantics = [#tpu.dimension_semantics<parallel>, #tpu.dimension_semantics<parallel>], iteration_bounds = array<i64: 1, 2>, scalar_prefetch = 0 : i64, scratch_operands = 0 : i64, tpu.core_type = #tpu.core_type<tc>, window_params = [{transform_indices = @transform_0, window_bounds = array<i64: 1, 16, 128>}, {pipeline_mode = #tpu.pipeline_mode<synchronous>, transform_indices = @transform_1, window_bounds = array<i64: 128, 32>}, {transform_indices = @transform_2, window_bounds = array<i64: 16, 32>}, {transform_indices = @transform_3, window_bounds = array<i64: 1, 16, 32>}]} {
    %c0 = arith.constant 0 : index
    %c0_0 = arith.constant 0 : index
    %c0_1 = arith.constant 0 : index
    %0 = vector.load %arg2[%c0, %c0_0, %c0_1] : memref<1x16x128xf32, #tpu.memory_space<vmem>>, vector<1x16x128xf32>
    %1 = vector.shape_cast %0 : vector<1x16x128xf32> to vector<16x128xf32>
    %c0_2 = arith.constant 0 : index
    %c0_3 = arith.constant 0 : index
    %2 = vector.load %arg3[%c0_2, %c0_3] : memref<128x32xf32, #tpu.memory_space<vmem>>, vector<128x32xf32>
    %cst = arith.constant dense<0.000000e+00> : vector<16x32xf32>
    %3 = tpu.matmul %1, %2, %cst {dimension_numbers = #tpu.dot_dimension_numbers<[1], [0], [0], [1], [0, 0, 1, 1], [], []>} : vector<16x128xf32>, vector<128x32xf32>, vector<16x32xf32> -> vector<16x32xf32>
    %c0_4 = arith.constant 0 : index
    %c0_5 = arith.constant 0 : index
    %4 = vector.load %arg4[%c0_4, %c0_5] : memref<16x32xf32, #tpu.memory_space<vmem>>, vector<16x32xf32>
    %5 = arith.addf %3, %4 : vector<16x32xf32>
    %c0_6 = arith.constant 0 : index
    %c0_7 = arith.constant 0 : index
    %c0_8 = arith.constant 0 : index
    %6 = vector.load %arg5[%c0_6, %c0_7, %c0_8] : memref<1x16x32xf32, #tpu.memory_space<vmem>>, vector<1x16x32xf32>
    %7 = vector.shape_cast %6 : vector<1x16x32xf32> to vector<16x32xf32>
    %8 = vector.shape_cast %5 : vector<16x32xf32> to vector<1x16x32xf32>
    tpu.vector_store %arg5[%c0_6, %c0_7, %c0_8], %8 {strides = array<i32>} : memref<1x16x32xf32, #tpu.memory_space<vmem>>, vector<1x16x32xf32>,
    return
  }
  func.func @transform_0(%arg0: i32, %arg1: i32) -> (i32, i32, i32) {
    %c0_i32 = arith.constant 0 : i32
    %c0_i32_0 = arith.constant 0 : i32
    return %arg1, %arg0, %c0_i32 : i32, i32, i32
  }
  func.func @transform_1(%arg0: i32, %arg1: i32) -> (i32, i32) {
    %c0_i32 = arith.constant 0 : i32
    %c0_i32_0 = arith.constant 0 : i32
    %c0_i32_1 = arith.constant 0 : i32
    return %c0_i32, %c0_i32_0 : i32, i32
  }
  func.func @transform_2(%arg0: i32, %arg1: i32) -> (i32, i32) {
    %c0_i32 = arith.constant 0 : i32
    %c0_i32_0 = arith.constant 0 : i32
    return %arg0, %c0_i32 : i32, i32
  }
  func.func @transform_3(%arg0: i32, %arg1: i32) -> (i32, i32, i32) {
    %c0_i32 = arith.constant 0 : i32
    %c0_i32_0 = arith.constant 0 : i32
    return %arg1, %arg0, %c0_i32 : i32, i32, i32
  }
}

</mosaic_0001>

<llo_original>
// kernel: embeddings_forward.2
$region0: #{embeddings_forward.2}
  #allocation0 [shape = 'u32[]', space=smem, size = 0x4, offset = 0x4, fixed_abs, tag = 'smem constant byte address 0x4 - core index']
  #allocation1 [shape = 'u32[72,128]{1,0:T(1,128)}', space=vmem, size = 0x9000, scoped, tag = 'internal scratch']
  #allocation2 [shape = 'u32[2048]{0}', space=vmem, size = 0x2000, scoped, tag = 'scoped memory for embeddings_forward.2']
  #allocation3 [shape = 'u32[2048]{0}', space=vmem, size = 0x2000, scoped, tag = 'scoped memory for embeddings_forward.2']
  #allocation4 [shape = 'u32[2048]{0}', space=vmem, size = 0x2000, scoped, tag = 'scoped memory for embeddings_forward.2']
  #allocation5 [shape = 'u32[2048]{0}', space=vmem, size = 0x2000, scoped, tag = 'scoped memory for embeddings_forward.2']
  #allocation6 [shape = 'u32[2048]{0}', space=vmem, size = 0x2000, scoped, tag = 'scoped memory for embeddings_forward.2']
  %s0 = inlined_call_operand.vmem [shape: f32[128,32], index: 0, kind: input, shape index: {}]
  %s1 = inlined_call_operand.vmem [shape: f32[16,32], index: 1, kind: input, shape index: {}]
  %s2 = inlined_call_operand.vmem [shape: f32[2,16,64], index: 2, kind: input, shape index: {}]
  %s3 = inlined_call_operand.<no memory space> [shape: f32[], index: 3, kind: input, shape index: {}]
  %s4 = inlined_call_operand.hbm [shape: f32[2,16,32], index: 4, kind: output, shape index: {}]
  %s5 = sld [smem:[#allocation0]]
  $region45: #{embeddings_forward.2} parent=0
    _
  %s7 = ssub.s32 1, %s5
  %s8 = scalar_select 0, %s7, %s5
  %v9 = vstv %s3
  $region1: #{embeddings_forward.2} parent=0
    #allocation7 [shape = 'u8[16384]{0}', space=vmem, size = 0x4000, scoped, tag = 'output window, operand 0']
    #allocation8 [shape = 's32[2]{0}', space=sflag, size = 0x8, scoped, tag = 'scoped memory for embeddings_forward.2']
    %10 = vsyncpa [#allocation8], 0
    %s11 = scalar_lea.sflag [#allocation8], 1
    %12 = vsyncpa %s11, 0
    loop: start=0, step=1, limit=4
    $region2: #{embeddings_forward.2} parent=1 // loop_pre_header
      _
    $region3: #{embeddings_forward.2} parent=1 // loop_header
      %s14 = sphi 0, %s18
      %p15 = scmp.ge.s32.totalorder %s14, 4
      %s21 = sphi 0, %s33
      %s22 = sphi 0, %s29
      %s23 = sphi 0, %s21
      %s24 = sphi 0, %s22
      %s25 = sphi 0, %s23
      %s26 = sphi 0, %s24
      %s38 = sphi 0, %s40
      %s41 = sphi 0, %s38
      %s42 = sphi 0, %s41
      %s58 = sphi 0, %s42
      %s62 = sphi 0, %s62
      %s64 = sphi 0, %s62
      %s65 = sphi 0, %s64
      %s79 = sphi 0, %s65
      %s85 = sphi 0, %s87
      %s88 = sphi 0, %s85
      %s89 = sphi 0, %s88
      %s105 = sphi 0, %s89
      %s113 = sphi 0, %s115
      %s116 = sphi 0, %s113
      %s117 = sphi 0, %s116
      %s133 = sphi 0, %s117
    $region4: #{embeddings_forward.2} parent=1 // loop_header_branch
      %17 = sbr.rel (%p15) target = $region8
    $region5: #{embeddings_forward.2} parent=1 // loop_body
      %s19 = ssub.s32 %s14, 1
      %s20 = ssub.s32 %s14, 2
      %s27 = sadd.s32 1, %s22
      %p28 = scmp.ge.s32.totalorder %s27, 2
      %s29 = scalar_select %p28, 0, %s27
      %s30 = sadd.s32 1, %s21
      %s31 = scalar_select %p28, %s30, %s21
      %p32 = scmp.ge.s32.totalorder %s31, 1
      %s33 = scalar_select %p32, 0, %s31
      %s34 = ssub.s32 %s22, %s29
      %s35 = ssub.s32 %s21, %s33
      %s36 = sor.u32 %s34, %s35
      %p37 = scmp.eq.s32.totalorder %s36, 0
      %s39 = sadd.s32 %s38, 1
      %s40 = scalar_select %p37, %s38, %s39
      %p43 = pneg %p37
      %p44 = scmp.eq.s32.totalorder %s14, 1
      %p45 = por %p43, %p44
      %p46 = scmp.ne.s32.totalorder %s38, %s41
      %p47 = scmp.eq.s32.totalorder %s14, 0
      %p48 = por %p46, %p47
      %p49 = scmp.ne.s32.totalorder %s38, %s41
      %p50 = scmp.eq.s32.totalorder %s19, 1
      %p51 = por %p49, %p50
      %p52 = scmp.ne.s32.totalorder %s41, %s42
      %p53 = scmp.eq.s32.totalorder %s19, 0
      %p54 = por %p52, %p53
      %p55 = scmp.ne.s32.totalorder %s41, %s42
      %p56 = scmp.eq.s32.totalorder %s20, 1
      %p57 = por %p55, %p56
      %p59 = scmp.ne.s32.totalorder %s42, %s58
      %p60 = scmp.eq.s32.totalorder %s20, 0
      %p61 = por %p59, %p60
      %s63 = sadd.s32 %s62, 1
      %p66 = scmp.eq.s32.totalorder %s14, 1
      %p67 = scmp.ne.s32.totalorder %s62, %s64
      %p68 = scmp.eq.s32.totalorder %s14, 0
      %p69 = por %p67, %p68
      %p70 = scmp.ne.s32.totalorder %s62, %s64
      %p71 = scmp.eq.s32.totalorder %s19, 1
      %p72 = por %p70, %p71
      %p73 = scmp.ne.s32.totalorder %s64, %s65
      %p74 = scmp.eq.s32.totalorder %s19, 0
      %p75 = por %p73, %p74
      %p76 = scmp.ne.s32.totalorder %s64, %s65
      %p77 = scmp.eq.s32.totalorder %s20, 1
      %p78 = por %p76, %p77
      %p80 = scmp.ne.s32.totalorder %s65, %s79
      %p81 = scmp.eq.s32.totalorder %s20, 0
      %p82 = por %p80, %p81
      %s83 = ssub.s32 %s21, %s33
      %p84 = scmp.eq.s32.totalorder %s83, 0
      %s86 = sadd.s32 %s85, 1
      %s87 = scalar_select %p84, %s85, %s86
      %p90 = pneg %p84
      %p91 = scmp.eq.s32.totalorder %s14, 1
      %p92 = por %p90, %p91
      %p93 = scmp.ne.s32.totalorder %s85, %s88
      %p94 = scmp.eq.s32.totalorder %s14, 0
      %p95 = por %p93, %p94
      %p96 = scmp.ne.s32.totalorder %s85, %s88
      %p97 = scmp.eq.s32.totalorder %s19, 1
      %p98 = por %p96, %p97
      %p99 = scmp.ne.s32.totalorder %s88, %s89
      %p100 = scmp.eq.s32.totalorder %s19, 0
      %p101 = por %p99, %p100
      %p102 = scmp.ne.s32.totalorder %s88, %s89
      %p103 = scmp.eq.s32.totalorder %s20, 1
      %p104 = por %p102, %p103
      %p106 = scmp.ne.s32.totalorder %s89, %s105
      %p107 = scmp.eq.s32.totalorder %s20, 0
      %p108 = por %p106, %p107
      %s109 = ssub.s32 %s22, %s29
      %s110 = ssub.s32 %s21, %s33
      %s111 = sor.u32 %s109, %s110
      %p112 = scmp.eq.s32.totalorder %s111, 0
      %s114 = sadd.s32 %s113, 1
      %s115 = scalar_select %p112, %s113, %s114
      %p118 = pneg %p112
      %p119 = scmp.eq.s32.totalorder %s14, 1
      %p120 = por %p118, %p119
      %p121 = scmp.ne.s32.totalorder %s113, %s116
      %p122 = scmp.eq.s32.totalorder %s14, 0
      %p123 = por %p121, %p122
      %p124 = scmp.ne.s32.totalorder %s113, %s116
      %p125 = scmp.eq.s32.totalorder %s19, 1
      %p126 = por %p124, %p125
      %p127 = scmp.ne.s32.totalorder %s116, %s117
      %p128 = scmp.eq.s32.totalorder %s19, 0
      %p129 = por %p127, %p128
      %p130 = scmp.ne.s32.totalorder %s116, %s117
      %p131 = scmp.eq.s32.totalorder %s20, 1
      %p132 = por %p130, %p131
      %p134 = scmp.ne.s32.totalorder %s117, %s133
      %p135 = scmp.eq.s32.totalorder %s20, 0
      %p136 = por %p134, %p135
      %p137 = scmp.le.s32.totalorder 1, %s14
      %p138 = scmp.lt.s32.totalorder %s14, 3
      %p139 = pnand %p137, %p138
      %p140 = pneg %p139
      // Predicated region
      $region9: #{embeddings_forward.2} parent=5 // pred_check
        _
      $region10: #{embeddings_forward.2} parent=5 // pred_check_branch
        %142 = sbr.rel (%p139) target = $region12
      $region11: #{embeddings_forward.2} parent=5 // pred_region
        %s143 = ssub.s32 %s14, 1
        // Predicated region
        $region13: #{embeddings_forward.2} parent=11 // pred_check
          %p144 = pneg %p75
        $region14: #{embeddings_forward.2} parent=11 // pred_check_branch
          %146 = sbr.rel (%p144) target = $region16
        $region15: #{embeddings_forward.2} parent=11 // pred_region
          _
        $region16: #{embeddings_forward.2} parent=11 // pred_fallthru
          _
        // Predicated region
        $region17: #{embeddings_forward.2} parent=11 // pred_check
          %p147 = pneg %p101
        $region18: #{embeddings_forward.2} parent=11 // pred_check_branch
          %149 = sbr.rel (%p147) target = $region20
        $region19: #{embeddings_forward.2} parent=11 // pred_region
          %s150 = smul.u32 2, %s23
          %p151 = scmp.lt.s32.totalorder %s150, 1
          %s152 = scalar_select %p151, %s150, 1
          %s153 = smul.addr %s152, 8
          %s154 = scalar_lea.vmem %s1, %s153
          %s155 = smul.u32 2, %s23
        $region20: #{embeddings_forward.2} parent=11 // pred_fallthru
          _
      $region12: #{embeddings_forward.2} parent=5 // pred_fallthru
        _
      %p156 = scmp.lt.s32.totalorder %s14, 2
      // Predicated region
      $region21: #{embeddings_forward.2} parent=5 // pred_check
        %p157 = pneg %p156
      $region22: #{embeddings_forward.2} parent=5 // pred_check_branch
        %159 = sbr.rel (%p157) target = $region24
      $region23: #{embeddings_forward.2} parent=5 // pred_region
        // Predicated region
        $region25: #{embeddings_forward.2} parent=23 // pred_check
          %p160 = pneg %p48
        $region26: #{embeddings_forward.2} parent=23 // pred_check_branch
          %162 = sbr.rel (%p160) target = $region28
        $region27: #{embeddings_forward.2} parent=23 // pred_region
          %s163 = smul.u32 2, %s21
          %p164 = scmp.lt.s32.totalorder %s22, 1
          %s165 = scalar_select %p164, %s22, 1
          %p166 = scmp.lt.s32.totalorder %s163, 1
          %s167 = scalar_select %p166, %s163, 1
          %s168 = smul.addr %s165, 2
          %s169 = sadd.s32 %s167, %s168
          %s170 = smul.addr %s169, 8
          %s171 = scalar_lea.vmem %s2, %s170
          %s172 = smul.u32 2, %s21
        $region28: #{embeddings_forward.2} parent=23 // pred_fallthru
          _
      $region24: #{embeddings_forward.2} parent=5 // pred_fallthru
        _
      %p173 = scmp.le.s32.totalorder 1, %s14
      %p174 = scmp.lt.s32.totalorder %s14, 3
      %p175 = pnand %p173, %p174
      %p176 = pneg %p175
      // Predicated region
      $region29: #{embeddings_forward.2} parent=5 // pred_check
        _
      $region30: #{embeddings_forward.2} parent=5 // pred_check_branch
        %178 = sbr.rel (%p175) target = $region32
      $region31: #{embeddings_forward.2} parent=5 // pred_region
        #allocation9 [shape = 'u8[8192]{0}', space=vmem, size = 0x2000, dematerialized = true, scoped, tag = 'FusionAdapter Buffer %fusion.1 = f32[2,16,128]{2,1,0:T(8,128)} fusion(%param_2.1, %param_3), kind=kLoop, calls=%fused_computation.2.clone, metadata={op_name="jit(embeddings_forward)/jit(_pad)/pad" stack_frame_id=9}']
        %s179 = ssub.s32 %s14, 1
        %s180 = smul.u32 2, %s23
        %p181 = scmp.lt.s32.totalorder %s24, 1
        %s182 = scalar_select %p181, %s24, 1
        %p183 = scmp.lt.s32.totalorder %s180, 1
        %s184 = scalar_select %p183, %s180, 1
        %s185 = smul.addr %s182, 2
        %s186 = sadd.s32 %s184, %s185
        %s187 = smul.addr %s186, 8
        %s188 = scalar_lea.vmem %s2, %s187
        %p189 = pneg %p54
        %p190 = pneg %p51
        %p191 = pneg %p75
        %p192 = pneg %p72
        %s193 = smul.u32 2, %s23
        %p194 = scmp.lt.s32.totalorder %s193, 1
        %s195 = scalar_select %p194, %s193, 1
        %s196 = smul.addr %s195, 8
        %s197 = scalar_lea.vmem %s1, %s196
        %p198 = pneg %p101
        %p199 = pneg %p98
        %p200 = pneg %p129
        %p201 = pneg %p126
        %s202 = sand.u32 %s116, 1
        %s203 = scalar_lea.sflag [#allocation8], %s202
        %s204 = sand.u32 %s116, 1
        %s205 = smul.addr %s204, 16
        %s206 = scalar_lea.vmem [#allocation7], %s205
        %s207 = smul.u32 2, %s23
        %p208 = scmp.lt.s32.totalorder %s24, 1
        %s209 = scalar_select %p208, %s24, 1
        %p210 = scmp.lt.s32.totalorder %s207, 1
        %s211 = scalar_select %p210, %s207, 1
        %s212 = smul.addr %s209, 2
        %s213 = sadd.s32 %s211, %s212
        %s214 = smul.addr %s213, 8
        %s215 = scalar_lea.vmem %s2, %s214
        %s216 = smul.u32 2, %s23
        %s217 = smul.u32 2, %s23
        %p218 = scmp.lt.s32.totalorder %s217, 1
        %s219 = scalar_select %p218, %s217, 1
        %s220 = smul.addr %s219, 8
        %s221 = scalar_lea.vmem %s1, %s220
        %s222 = smul.u32 2, %s23
        %s223 = smul.u32 2, %s23
        %v224 = vld [vmem:[%s215] sm:$0xff]
        %v225 = vlaneseq
        %v226 = vand.u32 %v225, 127
        %vm228 = vcmp.lt.s32.totalorder %v226, 64
        %v229 = vsel %vm228, %v224, %v9
        %s231 = ssub.s32 256, 1
        %232 = vst [vmem:[#allocation9] sm:%s231] %v229
        %s233 = scalar_lea.vmem %s215, 8
        %v234 = vld [vmem:[%s233] sm:$0xff]
        %v235 = vlaneseq
        %v236 = vand.u32 %v235, 127
        %vm238 = vcmp.lt.s32.totalorder %v236, 64
        %v239 = vsel %vm238, %v234, %v9
        %s240 = scalar_lea.vmem [#allocation9], 8
        %s242 = ssub.s32 256, 1
        %243 = vst [vmem:[%s240] sm:%s242] %v239
        %v244 = vld [vmem:[#allocation9] sm:$0xff]
        %v245 = vld [vmem:[#allocation9 + $0x8] sm:$0xff]
        %v246 = vld [vmem:[%s0] sm:$0xff]
        %v247 = vld [vmem:[%s0 + $0x8] sm:$0xff]
        %v248 = vld [vmem:[%s0 + $0x10] sm:$0xff]
        %v249 = vld [vmem:[%s0 + $0x18] sm:$0xff]
        %v250 = vld [vmem:[%s0 + $0x20] sm:$0xff]
        %v251 = vld [vmem:[%s0 + $0x28] sm:$0xff]
        %v252 = vld [vmem:[%s0 + $0x30] sm:$0xff]
        %v253 = vld [vmem:[%s0 + $0x38] sm:$0xff]
        %v254 = vld [vmem:[%s0 + $0x40] sm:$0xff]
        %v255 = vld [vmem:[%s0 + $0x48] sm:$0xff]
        %v256 = vld [vmem:[%s0 + $0x50] sm:$0xff]
        %v257 = vld [vmem:[%s0 + $0x58] sm:$0xff]
        %v258 = vld [vmem:[%s0 + $0x60] sm:$0xff]
        %v259 = vld [vmem:[%s0 + $0x68] sm:$0xff]
        %v260 = vld [vmem:[%s0 + $0x70] sm:$0xff]
        %v261 = vld [vmem:[%s0 + $0x78] sm:$0xff]
        %v262 = vld [vmem:[%s221] sm:$0xff]
        %v263 = vld [vmem:[%s221 + $0x8] sm:$0xff]
        %264 = vmatpush.msra.mxu0 %v261
        %265 = vmatpush.msra.mxu0 %v260
        %266 = vmatpush.msra.mxu0 %v259
        %267 = vmatpush.msra.mxu0 %v258
        %268 = vmatpush.msra.mxu0 %v257
        %269 = vmatpush.msra.mxu0 %v256
        %270 = vmatpush.msra.mxu0 %v255
        %271 = vmatpush.msra.mxu0 %v254
        %272 = vmatpush.msra.mxu0 %v253
        %273 = vmatpush.msra.mxu0 %v252
        %274 = vmatpush.msra.mxu0 %v251
        %275 = vmatpush.msra.mxu0 %v250
        %276 = vmatpush.msra.mxu0 %v249
        %277 = vmatpush.msra.mxu0 %v248
        %278 = vmatpush.msra.mxu0 %v247
        %279 = vmatpush.msra.mxu0 %v246
        %280 = vmatmul.f32.gmra.mxu0 %v244
        %v281 = vpop.f32.mrf.mxu0
        %v282 = vadd.f32 %v262, %v281
        %283 = vmatmul.f32.gmra.mxu0 %v245
        %v284 = vpop.f32.mrf.mxu0
        %v285 = vadd.f32 %v263, %v284
        %286 = vdwg.mxu0
        %vm287 = vcmask 261120
        %288 = vst.msk [vmem:[%s206] sm:$0xff] %vm287, %v282
        %289 = vst.msk [vmem:[%s206 + $0x8] sm:$0xff] %vm287, %v285
        %s290 = sand.u32 %s116, 1
        %s291 = scalar_lea.sflag [#allocation8], %s290
        %s292 = sand.u32 %s116, 1
        %s293 = smul.addr %s292, 16
        %s294 = scalar_lea.vmem [#allocation7], %s293
        // Predicated region
        $region33: #{embeddings_forward.2} parent=31 // pred_check
          %p295 = pneg %p126
        $region34: #{embeddings_forward.2} parent=31 // pred_check_branch
          %297 = sbr.rel (%p295) target = $region36
        $region35: #{embeddings_forward.2} parent=31 // pred_region
          %s298 = smul.u32 2, %s23
          %300 = vsyncadd %s291, 0
          %s301 = smul.addr %s24, 2
          %s302 = sadd.s32 %s298, %s301
          %s303 = smul.addr %s302, 8
          %s304 = scalar_lea.hbm %s4, %s303
          %s305 = sshll.u32 %s294, 4
          %s306 = int_to_ptr.vmem [resolvable:$true] %s305
          %s307 = sshll.u32 %s304, 4
          %s308 = int_to_ptr.hbm [resolvable:$true] %s307
          %313 = dma.vmem_to_hbm [thread:$0]  %s306, 256, %s308, %s291, 128, 128, 8
        $region36: #{embeddings_forward.2} parent=31 // pred_fallthru
          _
      $region32: #{embeddings_forward.2} parent=5 // pred_fallthru
        _
      %p314 = scmp.le.s32.totalorder 2, %s14
      // Predicated region
      $region37: #{embeddings_forward.2} parent=5 // pred_check
        %p315 = pneg %p314
      $region38: #{embeddings_forward.2} parent=5 // pred_check_branch
        %317 = sbr.rel (%p315) target = $region40
      $region39: #{embeddings_forward.2} parent=5 // pred_region
        %s318 = ssub.s32 %s14, 2
        // Predicated region
        $region41: #{embeddings_forward.2} parent=39 // pred_check
          %p319 = pneg %p132
        $region42: #{embeddings_forward.2} parent=39 // pred_check_branch
          %321 = sbr.rel (%p319) target = $region44
        $region43: #{embeddings_forward.2} parent=39 // pred_region
          %s322 = sand.u32 %s117, 1
          %s323 = scalar_lea.sflag [#allocation8], %s322
          %s324 = sand.u32 %s117, 1
          %s325 = smul.addr %s324, 16
          %s326 = scalar_lea.vmem [#allocation7], %s325
          %328 = dma.done %s323, 256
        $region44: #{embeddings_forward.2} parent=39 // pred_fallthru
          _
      $region40: #{embeddings_forward.2} parent=5 // pred_fallthru
        _
    $region6: #{embeddings_forward.2} parent=1 // loop_footer
      %s18 = sadd.s32 1, %s14
    $region7: #{embeddings_forward.2} parent=1 // loop_footer_branch
      %13 = sbr.rel target = $region3
    $region8: #{embeddings_forward.2} parent=1 // loop_exit
      _
    %329 = vsyncpa [#allocation8], 1
    %s330 = scalar_lea.sflag [#allocation8], 1
    %331 = vsyncpa %s330, 1

</llo_original>
